<compile_context>
chip_gen: v7x
topology: tpu7x:2x2x1
jax: 0.10.0
libtpu: 0.0.40
codegen_flags: <defaults>
</compile_context>

<pallas_src>
import jax
import jax.numpy as jnp
from jax.experimental import pallas as pl
from jax.experimental.pallas import tpu as pltpu

K = 8  # JPEG-style block size, fixed by the module


def _deblock_kernel(x_ref, o_ref):
    # x_ref: (TBR, WB, K, K)    blocks for TBR block-rows, raster order
    # o_ref: (TBR * K, WB * K)  the corresponding TBR*K rows of the image
    x = x_ref[...]
    # out[r*K + p, j*K + q] = x[r, j, p, q]
    y = jnp.transpose(x, (0, 2, 1, 3))          # (TBR, K, WB, K)
    o_ref[...] = y.reshape(o_ref.shape)


def _pick_block_rows(num_block_rows, bytes_per_block_row, budget_bytes=1 << 20):
    """Largest divisor of num_block_rows whose raw tile payload fits the budget."""
    tbr = max(1, min(num_block_rows, budget_bytes // max(bytes_per_block_row, 1)))
    while num_block_rows % tbr:
        tbr -= 1
    return tbr


def deblock_splitting(x, height, width, *, block_rows=None):
    """x: (B, (H//8)*(W//8), 8, 8) -> (B, H, W), matching _DeBlockSplitting.forward."""
    B = x.shape[0]
    assert height % K == 0 and width % K == 0
    HB, WB = height // K, width // K

    # Free (bitcast) view of the contiguous input: (B, L, 8, 8) -> (B, HB, WB, 8, 8).
    x5 = x.reshape(B, HB, WB, K, K)

    if block_rows is None:
        block_rows = _pick_block_rows(HB, WB * K * K * x.dtype.itemsize)
    assert HB % block_rows == 0
    TBR = block_rows          # block-rows of the image per grid step
    TH = TBR * K              # image rows produced per grid step

    out = pl.pallas_call(
        _deblock_kernel,
        out_shape=jax.ShapeDtypeStruct((B, height, width), x.dtype),
        grid=(B, HB // TBR),
        in_specs=[
            pl.BlockSpec((None, TBR, WB, K, K), lambda b, t: (b, t, 0, 0, 0)),
        ],
        out_specs=pl.BlockSpec((None, TH, width), lambda b, t: (b, t, 0)),
        compiler_params=pltpu.CompilerParams(
            dimension_semantics=("parallel", "parallel"),
            vmem_limit_bytes=48 * 1024 * 1024,
        ),
    )(x5)
    return out


def _reference(x, height, width):
    # Pure-JAX reference matching the PyTorch forward exactly.
    B = x.shape[0]
    xr = x.reshape(B, height // K, width // K, K, K)
    return jnp.transpose(xr, (0, 1, 3, 2, 4)).reshape(B, height, width)


if __name__ == "__main__":
    key = jax.random.PRNGKey(0)

    # Small case consistent with the module: batch=2, 16x16 image -> 4 blocks of 8x8.
    B, H, W = 2, 16, 16
    x = jax.random.uniform(key, (B, (H // K) * (W // K), K, K), dtype=jnp.float32)

    out = deblock_splitting(x, H, W)
    jax.block_until_ready(out)

    ref = _reference(x, H, W)
    assert out.shape == (B, H, W)
    assert jnp.array_equal(out, ref)

    # Second (still small) case with a lane-dense width and >1 H-tile per image,
    # exercising the tiled grid path.
    B2, H2, W2 = 2, 32, 256
    x2 = jax.random.uniform(
        jax.random.PRNGKey(0), (B2, (H2 // K) * (W2 // K), K, K), dtype=jnp.float32
    )
    out2 = deblock_splitting(x2, H2, W2, block_rows=2)   # grid = (2, 2)
    jax.block_until_ready(out2)
    assert jnp.array_equal(out2, _reference(x2, H2, W2))

    print("KERNEL_OK")
</pallas_src>

<mosaic_0001>
module attributes {stable_mosaic.version = 11 : i64} {
  func.func @_deblock_kernel(%arg0: i32, %arg1: i32, %arg2: memref<1x2x2x8x8xf32, #tpu.memory_space<vmem>>, %arg3: memref<1x16x16xf32, #tpu.memory_space<vmem>>) attributes {dimension_semantics = [#tpu.dimension_semantics<parallel>, #tpu.dimension_semantics<parallel>], iteration_bounds = array<i64: 2, 1>, scalar_prefetch = 0 : i64, scratch_operands = 0 : i64, tpu.core_type = #tpu.core_type<tc>, window_params = [{transform_indices = @transform_0, window_bounds = array<i64: 1, 2, 2, 8, 8>}, {transform_indices = @transform_1, window_bounds = array<i64: 1, 16, 16>}]} {
    %c0 = arith.constant 0 : index
    %c0_0 = arith.constant 0 : index
    %c0_1 = arith.constant 0 : index
    %c0_2 = arith.constant 0 : index
    %c0_3 = arith.constant 0 : index
    %0 = vector.load %arg2[%c0, %c0_0, %c0_1, %c0_2, %c0_3] : memref<1x2x2x8x8xf32, #tpu.memory_space<vmem>>, vector<1x2x2x8x8xf32>
    %1 = vector.shape_cast %0 : vector<1x2x2x8x8xf32> to vector<2x2x8x8xf32>
    %2 = tpu.transpose %1, [0, 2, 1, 3] : vector<2x2x8x8xf32> -> vector<2x8x2x8xf32>
    %3 = vector.shape_cast %2 : vector<2x8x2x8xf32> to vector<16x16xf32>
    %c0_4 = arith.constant 0 : index
    %c0_5 = arith.constant 0 : index
    %c0_6 = arith.constant 0 : index
    %4 = vector.load %arg3[%c0_4, %c0_5, %c0_6] : memref<1x16x16xf32, #tpu.memory_space<vmem>>, vector<1x16x16xf32>
    %5 = vector.shape_cast %4 : vector<1x16x16xf32> to vector<16x16xf32>
    %6 = vector.shape_cast %3 : vector<16x16xf32> to vector<1x16x16xf32>
    tpu.vector_store %arg3[%c0_4, %c0_5, %c0_6], %6 {strides = array<i32>} : memref<1x16x16xf32, #tpu.memory_space<vmem>>, vector<1x16x16xf32>,
    return
  }
  func.func @transform_0(%arg0: i32, %arg1: i32) -> (i32, i32, i32, i32, i32) {
    %c0_i32 = arith.constant 0 : i32
    %c0_i32_0 = arith.constant 0 : i32
    %c0_i32_1 = arith.constant 0 : i32
    %c0_i32_2 = arith.constant 0 : i32
    return %arg0, %arg1, %c0_i32, %c0_i32_0, %c0_i32_1 : i32, i32, i32, i32, i32
  }
  func.func @transform_1(%arg0: i32, %arg1: i32) -> (i32, i32, i32) {
    %c0_i32 = arith.constant 0 : i32
    %c0_i32_0 = arith.constant 0 : i32
    return %arg0, %arg1, %c0_i32 : i32, i32, i32
  }
}

</mosaic_0001>

<llo_original>
// kernel: tpu_custom_call.1
$region0: #{tpu_custom_call.1}
  #allocation0 [shape = 'u32[]', space=smem, size = 0x4, offset = 0x4, fixed_abs, tag = 'smem constant byte address 0x4 - core index']
  #allocation1 [shape = 'u32[144,128]{1,0:T(1,128)}', space=vmem, size = 0x12000, scoped, tag = 'internal scratch']
  %s0 = inlined_call_operand.hbm [shape: f32[2,2,2,8,8], index: 0, kind: input, shape index: {}]
  %s1 = inlined_call_operand.hbm [shape: f32[2,16,16], index: 1, kind: output, shape index: {}]
  %s2 = sld [smem:[#allocation0]]
  $region41: #{tpu_custom_call.1} parent=0
    _
  %s4 = ssub.s32 1, %s2
  %s5 = scalar_select 0, %s4, %s2
  $region1: #{tpu_custom_call.1} parent=0
    #allocation2 [shape = 'u8[32768]{0}', space=vmem, size = 0x8000, scoped, tag = 'input window, operand 0']
    #allocation3 [shape = 's32[2]{0}', space=sflag, size = 0x8, scoped, tag = 'scoped memory for tpu_custom_call.1']
    #allocation4 [shape = 's32[2]{0}', space=sflag, size = 0x8, scoped, tag = 'scoped memory for tpu_custom_call.1']
    #allocation5 [shape = 'u8[16384]{0}', space=vmem, size = 0x4000, scoped, tag = 'output window, operand 0']
    %6 = vsyncpa [#allocation3], 0
    %s7 = scalar_lea.sflag [#allocation3], 1
    %8 = vsyncpa %s7, 0
    %9 = vsyncpa [#allocation4], 0
    %s10 = scalar_lea.sflag [#allocation4], 1
    %11 = vsyncpa %s10, 0
    loop: start=0, step=1, limit=4
    $region2: #{tpu_custom_call.1} parent=1 // loop_pre_header
      _
    $region3: #{tpu_custom_call.1} parent=1 // loop_header
      %s13 = sphi 0, %s17
      %p14 = scmp.ge.s32.totalorder %s13, 4
      %s20 = sphi 0, %s32
      %s21 = sphi 0, %s28
      %s22 = sphi 0, %s20
      %s23 = sphi 0, %s21
      %s24 = sphi 0, %s22
      %s25 = sphi 0, %s23
      %s37 = sphi 0, %s39
      %s40 = sphi 0, %s37
      %s41 = sphi 0, %s40
      %s57 = sphi 0, %s41
      %s65 = sphi 0, %s67
      %s68 = sphi 0, %s65
      %s69 = sphi 0, %s68
      %s85 = sphi 0, %s69
    $region4: #{tpu_custom_call.1} parent=1 // loop_header_branch
      %16 = sbr.rel (%p14) target = $region8
    $region5: #{tpu_custom_call.1} parent=1 // loop_body
      %s18 = ssub.s32 %s13, 1
      %s19 = ssub.s32 %s13, 2
      %s26 = sadd.s32 1, %s21
      %p27 = scmp.ge.s32.totalorder %s26, 1
      %s28 = scalar_select %p27, 0, %s26
      %s29 = sadd.s32 1, %s20
      %s30 = scalar_select %p27, %s29, %s20
      %p31 = scmp.ge.s32.totalorder %s30, 2
      %s32 = scalar_select %p31, 0, %s30
      %s33 = ssub.s32 %s20, %s32
      %s34 = ssub.s32 %s21, %s28
      %s35 = sor.u32 %s33, %s34
      %p36 = scmp.eq.s32.totalorder %s35, 0
      %s38 = sadd.s32 %s37, 1
      %s39 = scalar_select %p36, %s37, %s38
      %p42 = pneg %p36
      %p43 = scmp.eq.s32.totalorder %s13, 1
      %p44 = por %p42, %p43
      %p45 = scmp.ne.s32.totalorder %s37, %s40
      %p46 = scmp.eq.s32.totalorder %s13, 0
      %p47 = por %p45, %p46
      %p48 = scmp.ne.s32.totalorder %s37, %s40
      %p49 = scmp.eq.s32.totalorder %s18, 1
      %p50 = por %p48, %p49
      %p51 = scmp.ne.s32.totalorder %s40, %s41
      %p52 = scmp.eq.s32.totalorder %s18, 0
      %p53 = por %p51, %p52
      %p54 = scmp.ne.s32.totalorder %s40, %s41
      %p55 = scmp.eq.s32.totalorder %s19, 1
      %p56 = por %p54, %p55
      %p58 = scmp.ne.s32.totalorder %s41, %s57
      %p59 = scmp.eq.s32.totalorder %s19, 0
      %p60 = por %p58, %p59
      %s61 = ssub.s32 %s20, %s32
      %s62 = ssub.s32 %s21, %s28
      %s63 = sor.u32 %s61, %s62
      %p64 = scmp.eq.s32.totalorder %s63, 0
      %s66 = sadd.s32 %s65, 1
      %s67 = scalar_select %p64, %s65, %s66
      %p70 = pneg %p64
      %p71 = scmp.eq.s32.totalorder %s13, 1
      %p72 = por %p70, %p71
      %p73 = scmp.ne.s32.totalorder %s65, %s68
      %p74 = scmp.eq.s32.totalorder %s13, 0
      %p75 = por %p73, %p74
      %p76 = scmp.ne.s32.totalorder %s65, %s68
      %p77 = scmp.eq.s32.totalorder %s18, 1
      %p78 = por %p76, %p77
      %p79 = scmp.ne.s32.totalorder %s68, %s69
      %p80 = scmp.eq.s32.totalorder %s18, 0
      %p81 = por %p79, %p80
      %p82 = scmp.ne.s32.totalorder %s68, %s69
      %p83 = scmp.eq.s32.totalorder %s19, 1
      %p84 = por %p82, %p83
      %p86 = scmp.ne.s32.totalorder %s69, %s85
      %p87 = scmp.eq.s32.totalorder %s19, 0
      %p88 = por %p86, %p87
      %p89 = scmp.le.s32.totalorder 1, %s13
      %p90 = scmp.lt.s32.totalorder %s13, 3
      %p91 = pnand %p89, %p90
      %p92 = pneg %p91
      // Predicated region
      $region9: #{tpu_custom_call.1} parent=5 // pred_check
        _
      $region10: #{tpu_custom_call.1} parent=5 // pred_check_branch
        %94 = sbr.rel (%p91) target = $region12
      $region11: #{tpu_custom_call.1} parent=5 // pred_region
        %s95 = ssub.s32 %s13, 1
      $region12: #{tpu_custom_call.1} parent=5 // pred_fallthru
        _
      %p96 = scmp.lt.s32.totalorder %s13, 2
      // Predicated region
      $region13: #{tpu_custom_call.1} parent=5 // pred_check
        %p97 = pneg %p96
      $region14: #{tpu_custom_call.1} parent=5 // pred_check_branch
        %99 = sbr.rel (%p97) target = $region16
      $region15: #{tpu_custom_call.1} parent=5 // pred_region
        // Predicated region
        $region17: #{tpu_custom_call.1} parent=15 // pred_check
          %p100 = pneg %p47
        $region18: #{tpu_custom_call.1} parent=15 // pred_check_branch
          %102 = sbr.rel (%p100) target = $region20
        $region19: #{tpu_custom_call.1} parent=15 // pred_region
          %s103 = sand.u32 %s37, 1
          %s104 = scalar_lea.sflag [#allocation3], %s103
          %s105 = sand.u32 %s37, 1
          %s106 = smul.addr %s105, 32
          %s107 = scalar_lea.vmem [#allocation2], %s106
          %s108 = smul.u32 2, %s21
          %s110 = ssub.s32 512, 512
          %111 = vsyncadd %s104, %s110
          %s112 = smul.addr %s108, 2
          %s113 = smul.addr %s20, 4
          %s114 = sadd.s32 %s112, %s113
          %s115 = smul.addr %s114, 128
          %s116 = scalar_lea.hbm %s0, %s115
          %s117 = sshll.u32 %s107, 4
          %s118 = int_to_ptr.vmem [resolvable:$true] %s117
          %123 = dma.hbm_to_vmem [thread:$0]  %s116, 512, %s118, %s104, 128, 128, 8
        $region20: #{tpu_custom_call.1} parent=15 // pred_fallthru
          _
      $region16: #{tpu_custom_call.1} parent=5 // pred_fallthru
        _
      %p124 = scmp.le.s32.totalorder 1, %s13
      %p125 = scmp.lt.s32.totalorder %s13, 3
      %p126 = pnand %p124, %p125
      %p127 = pneg %p126
      // Predicated region
      $region21: #{tpu_custom_call.1} parent=5 // pred_check
        _
      $region22: #{tpu_custom_call.1} parent=5 // pred_check_branch
        %129 = sbr.rel (%p126) target = $region24
      $region23: #{tpu_custom_call.1} parent=5 // pred_region
        %s130 = ssub.s32 %s13, 1
        %s131 = sand.u32 %s40, 1
        %s132 = scalar_lea.sflag [#allocation3], %s131
        %s133 = sand.u32 %s40, 1
        %s134 = smul.addr %s133, 32
        %s135 = scalar_lea.vmem [#allocation2], %s134
        // Predicated region
        $region25: #{tpu_custom_call.1} parent=23 // pred_check
          %p136 = pneg %p53
        $region26: #{tpu_custom_call.1} parent=23 // pred_check_branch
          %138 = sbr.rel (%p136) target = $region28
        $region27: #{tpu_custom_call.1} parent=23 // pred_region
          %139 = dma.done %s132, 512
        $region28: #{tpu_custom_call.1} parent=23 // pred_fallthru
          _
        %s140 = sand.u32 %s40, 1
        %s141 = scalar_lea.sflag [#allocation3], %s140
        %s142 = sand.u32 %s40, 1
        %s143 = smul.addr %s142, 32
        %s144 = scalar_lea.vmem [#allocation2], %s143
        %p145 = pneg %p53
        %p146 = pneg %p50
        %p147 = pneg %p81
        %p148 = pneg %p78
        %s149 = sand.u32 %s68, 1
        %s150 = scalar_lea.sflag [#allocation4], %s149
        %s151 = sand.u32 %s68, 1
        %s152 = smul.addr %s151, 16
        %s153 = scalar_lea.vmem [#allocation5], %s152
        %s154 = smul.u32 2, %s23
        %s155 = smul.u32 2, %s23
        %v156 = vld [vmem:[%s135] sm:$0xff]
        %v157 = vld [vmem:[%s135 + $0x8] sm:$0xff]
        %v158 = vld [vmem:[%s135 + $0x10] sm:$0xff]
        %v159 = vld [vmem:[%s135 + $0x18] sm:$0xff]
        %v160 = vcombine.high %v156, 0.0
        %v162 = vunpack.c.l.s4 1983009808
        %v163 = vunpack.c.0.s8 %v162
        %v164 = vlaneseq
        %v165 = vshrl.u32 %v164, 7
        %v166 = vsub.s32 %v163, %v165
        %v167 = vrot.slane %v156, %v166
        %v169 = vunpack.c.l.s4 1983009808
        %v170 = vunpack.c.0.s8 %v169
        %v171 = vlaneseq
        %v172 = vshrl.u32 %v171, 7
        %v173 = vsub.s32 %v170, %v172
        %v174 = vrot.slane %v160, %v173
        %v175 = vcombine.high %v157, 0.0
        %v177 = vunpack.c.l.s4 1983009808
        %v178 = vunpack.c.0.s8 %v177
        %v179 = vlaneseq
        %v180 = vshrl.u32 %v179, 7
        %v181 = vsub.s32 %v178, %v180
        %v182 = vrot.slane %v157, %v181
        %v184 = vunpack.c.l.s4 1983009808
        %v185 = vunpack.c.0.s8 %v184
        %v186 = vlaneseq
        %v187 = vshrl.u32 %v186, 7
        %v188 = vsub.s32 %v185, %v187
        %v189 = vrot.slane %v175, %v188
        %v190 = vcombine.low %v167, %v182
        %v191 = vcombine.high %v167, %v182
        %v193 = vunpack.c.l.s4 1934713408
        %v194 = vunpack.c.0.s8 %v193
        %v195 = vlaneseq
        %v196 = vshrl.u32 %v195, 7
        %v197 = vsub.s32 %v194, %v196
        %v198 = vrot.slane %v190, %v197
        %v200 = vunpack.c.l.s4 1934713408
        %v201 = vunpack.c.0.s8 %v200
        %v202 = vlaneseq
        %v203 = vshrl.u32 %v202, 7
        %v204 = vsub.s32 %v201, %v203
        %v205 = vrot.slane %v191, %v204
        %v206 = vcombine.low %v174, %v189
        %v207 = vcombine.high %v174, %v189
        %v209 = vunpack.c.l.s4 1934713408
        %v210 = vunpack.c.0.s8 %v209
        %v211 = vlaneseq
        %v212 = vshrl.u32 %v211, 7
        %v213 = vsub.s32 %v210, %v212
        %v214 = vrot.slane %v206, %v213
        %v216 = vunpack.c.l.s4 1934713408
        %v217 = vunpack.c.0.s8 %v216
        %v218 = vlaneseq
        %v219 = vshrl.u32 %v218, 7
        %v220 = vsub.s32 %v217, %v219
        %v221 = vrot.slane %v207, %v220
        %v222 = vcombine.high %v198, 0.0
        %v223 = vcombine.high %v205, 0.0
        %v224 = vcombine.high %v214, 0.0
        %v225 = vcombine.high %v221, 0.0
        %v226 = vcombine.high %v158, 0.0
        %v228 = vunpack.c.l.s4 1983009808
        %v229 = vunpack.c.0.s8 %v228
        %v230 = vlaneseq
        %v231 = vshrl.u32 %v230, 7
        %v232 = vsub.s32 %v229, %v231
        %v233 = vrot.slane %v158, %v232
        %v235 = vunpack.c.l.s4 1983009808
        %v236 = vunpack.c.0.s8 %v235
        %v237 = vlaneseq
        %v238 = vshrl.u32 %v237, 7
        %v239 = vsub.s32 %v236, %v238
        %v240 = vrot.slane %v226, %v239
        %v241 = vcombine.high %v159, 0.0
        %v243 = vunpack.c.l.s4 1983009808
        %v244 = vunpack.c.0.s8 %v243
        %v245 = vlaneseq
        %v246 = vshrl.u32 %v245, 7
        %v247 = vsub.s32 %v244, %v246
        %v248 = vrot.slane %v159, %v247
        %v250 = vunpack.c.l.s4 1983009808
        %v251 = vunpack.c.0.s8 %v250
        %v252 = vlaneseq
        %v253 = vshrl.u32 %v252, 7
        %v254 = vsub.s32 %v251, %v253
        %v255 = vrot.slane %v241, %v254
        %v256 = vcombine.low %v233, %v248
        %v257 = vcombine.high %v233, %v248
        %v259 = vunpack.c.l.s4 1934713408
        %v260 = vunpack.c.0.s8 %v259
        %v261 = vlaneseq
        %v262 = vshrl.u32 %v261, 7
        %v263 = vsub.s32 %v260, %v262
        %v264 = vrot.slane %v256, %v263
        %v266 = vunpack.c.l.s4 1934713408
        %v267 = vunpack.c.0.s8 %v266
        %v268 = vlaneseq
        %v269 = vshrl.u32 %v268, 7
        %v270 = vsub.s32 %v267, %v269
        %v271 = vrot.slane %v257, %v270
        %v272 = vcombine.low %v240, %v255
        %v273 = vcombine.high %v240, %v255
        %v275 = vunpack.c.l.s4 1934713408
        %v276 = vunpack.c.0.s8 %v275
        %v277 = vlaneseq
        %v278 = vshrl.u32 %v277, 7
        %v279 = vsub.s32 %v276, %v278
        %v280 = vrot.slane %v272, %v279
        %v282 = vunpack.c.l.s4 1934713408
        %v283 = vunpack.c.0.s8 %v282
        %v284 = vlaneseq
        %v285 = vshrl.u32 %v284, 7
        %v286 = vsub.s32 %v283, %v285
        %v287 = vrot.slane %v273, %v286
        %v288 = vcombine.high %v264, 0.0
        %v289 = vcombine.high %v271, 0.0
        %v290 = vcombine.high %v280, 0.0
        %v291 = vcombine.high %v287, 0.0
        %v292 = vcombine.low %v198, %v205
        %v294 = vunpack.c.l.s4 1983009808
        %v295 = vunpack.c.0.s8 %v294
        %v296 = vlaneseq
        %v297 = vshrl.u32 %v296, 7
        %v298 = vsub.s32 %v295, %v297
        %v299 = vrot.slane %v292, %v298
        %v300 = vcombine.low %v222, %v223
        %v302 = vunpack.c.l.s4 1983009808
        %v303 = vunpack.c.0.s8 %v302
        %v304 = vlaneseq
        %v305 = vshrl.u32 %v304, 7
        %v306 = vsub.s32 %v303, %v305
        %v307 = vrot.slane %v300, %v306
        %v308 = vcombine.low %v214, %v221
        %v310 = vunpack.c.l.s4 1983009808
        %v311 = vunpack.c.0.s8 %v310
        %v312 = vlaneseq
        %v313 = vshrl.u32 %v312, 7
        %v314 = vsub.s32 %v311, %v313
        %v315 = vrot.slane %v308, %v314
        %v316 = vcombine.low %v224, %v225
        %v318 = vunpack.c.l.s4 1983009808
        %v319 = vunpack.c.0.s8 %v318
        %v320 = vlaneseq
        %v321 = vshrl.u32 %v320, 7
        %v322 = vsub.s32 %v319, %v321
        %v323 = vrot.slane %v316, %v322
        %v324 = vcombine.low %v299, %v307
        %v326 = vunpack.c.l.s4 1934713408
        %v327 = vunpack.c.0.s8 %v326
        %v328 = vlaneseq
        %v329 = vshrl.u32 %v328, 7
        %v330 = vsub.s32 %v327, %v329
        %v331 = vrot.slane %v324, %v330
        %v332 = vcombine.low %v315, %v323
        %v334 = vunpack.c.l.s4 1934713408
        %v335 = vunpack.c.0.s8 %v334
        %v336 = vlaneseq
        %v337 = vshrl.u32 %v336, 7
        %v338 = vsub.s32 %v335, %v337
        %v339 = vrot.slane %v332, %v338
        %v340 = vcombine.low %v331, %v339
        %v341 = vcombine.high %v331, %v339
        %v342 = vcombine.low %v264, %v271
        %v344 = vunpack.c.l.s4 1983009808
        %v345 = vunpack.c.0.s8 %v344
        %v346 = vlaneseq
        %v347 = vshrl.u32 %v346, 7
        %v348 = vsub.s32 %v345, %v347
        %v349 = vrot.slane %v342, %v348
        %v350 = vcombine.low %v288, %v289
        %v352 = vunpack.c.l.s4 1983009808
        %v353 = vunpack.c.0.s8 %v352
        %v354 = vlaneseq
        %v355 = vshrl.u32 %v354, 7
        %v356 = vsub.s32 %v353, %v355
        %v357 = vrot.slane %v350, %v356
        %v358 = vcombine.low %v280, %v287
        %v360 = vunpack.c.l.s4 1983009808
        %v361 = vunpack.c.0.s8 %v360
        %v362 = vlaneseq
        %v363 = vshrl.u32 %v362, 7
        %v364 = vsub.s32 %v361, %v363
        %v365 = vrot.slane %v358, %v364
        %v366 = vcombine.low %v290, %v291
        %v368 = vunpack.c.l.s4 1983009808
        %v369 = vunpack.c.0.s8 %v368
        %v370 = vlaneseq
        %v371 = vshrl.u32 %v370, 7
        %v372 = vsub.s32 %v369, %v371
        %v373 = vrot.slane %v366, %v372
        %v374 = vcombine.low %v349, %v357
        %v376 = vunpack.c.l.s4 1934713408
        %v377 = vunpack.c.0.s8 %v376
        %v378 = vlaneseq
        %v379 = vshrl.u32 %v378, 7
        %v380 = vsub.s32 %v377, %v379
        %v381 = vrot.slane %v374, %v380
        %v382 = vcombine.low %v365, %v373
        %v384 = vunpack.c.l.s4 1934713408
        %v385 = vunpack.c.0.s8 %v384
        %v386 = vlaneseq
        %v387 = vshrl.u32 %v386, 7
        %v388 = vsub.s32 %v385, %v387
        %v389 = vrot.slane %v382, %v388
        %v390 = vcombine.low %v381, %v389
        %v391 = vcombine.high %v381, %v389
        %394 = vrot.lane.b32.xlu0 %v341, 8
        %v395 = vpop.permute.xlu0 %394
        %396 = vrot.lane.b32.xlu0 %v391, 8
        %v397 = vpop.permute.xlu0 %396
        %vm400 = vcmask 64512
        %v401 = vsel %vm400, %v340, %v395
        %v402 = vsel %vm400, %v390, %v397
        %vm403 = vcmask 130048
        %404 = vst.msk [vmem:[%s153] sm:$0xff] %vm403, %v401
        %405 = vst.msk [vmem:[%s153 + $0x8] sm:$0xff] %vm403, %v402
        %s406 = sand.u32 %s68, 1
        %s407 = scalar_lea.sflag [#allocation4], %s406
        %s408 = sand.u32 %s68, 1
        %s409 = smul.addr %s408, 16
        %s410 = scalar_lea.vmem [#allocation5], %s409
        // Predicated region
        $region29: #{tpu_custom_call.1} parent=23 // pred_check
          %p411 = pneg %p78
        $region30: #{tpu_custom_call.1} parent=23 // pred_check_branch
          %413 = sbr.rel (%p411) target = $region32
        $region31: #{tpu_custom_call.1} parent=23 // pred_region
          %s414 = smul.u32 2, %s23
          %s416 = ssub.s32 256, 256
          %417 = vsyncadd %s407, %s416
          %s418 = smul.addr %s22, 2
          %s419 = sadd.s32 %s414, %s418
          %s420 = smul.addr %s419, 128
          %s421 = scalar_lea.hbm %s1, %s420
          %s422 = sshll.u32 %s410, 4
          %s423 = int_to_ptr.vmem [resolvable:$true] %s422
          %428 = dma.vmem_to_hbm [thread:$0]  %s423, 256, %s421, %s407, 128, 128, 8
        $region32: #{tpu_custom_call.1} parent=23 // pred_fallthru
          _
      $region24: #{tpu_custom_call.1} parent=5 // pred_fallthru
        _
      %p429 = scmp.le.s32.totalorder 2, %s13
      // Predicated region
      $region33: #{tpu_custom_call.1} parent=5 // pred_check
        %p430 = pneg %p429
      $region34: #{tpu_custom_call.1} parent=5 // pred_check_branch
        %432 = sbr.rel (%p430) target = $region36
      $region35: #{tpu_custom_call.1} parent=5 // pred_region
        %s433 = ssub.s32 %s13, 2
        // Predicated region
        $region37: #{tpu_custom_call.1} parent=35 // pred_check
          %p434 = pneg %p84
        $region38: #{tpu_custom_call.1} parent=35 // pred_check_branch
          %436 = sbr.rel (%p434) target = $region40
        $region39: #{tpu_custom_call.1} parent=35 // pred_region
          %s437 = sand.u32 %s69, 1
          %s438 = scalar_lea.sflag [#allocation4], %s437
          %s439 = sand.u32 %s69, 1
          %s440 = smul.addr %s439, 16
          %s441 = scalar_lea.vmem [#allocation5], %s440
          %442 = dma.done %s438, 256
        $region40: #{tpu_custom_call.1} parent=35 // pred_fallthru
          _
      $region36: #{tpu_custom_call.1} parent=5 // pred_fallthru
        _
    $region6: #{tpu_custom_call.1} parent=1 // loop_footer
      %s17 = sadd.s32 1, %s13
    $region7: #{tpu_custom_call.1} parent=1 // loop_footer_branch
      %12 = sbr.rel target = $region3
    $region8: #{tpu_custom_call.1} parent=1 // loop_exit
      _
    %443 = vsyncpa [#allocation3], 1
    %s444 = scalar_lea.sflag [#allocation3], 1
    %445 = vsyncpa %s444, 1
    %446 = vsyncpa [#allocation4], 1
    %s447 = scalar_lea.sflag [#allocation4], 1
    %448 = vsyncpa %s447, 1

</llo_original>
